<compile_context>
chip_gen: v7x
topology: tpu7x:2x2x1
jax: 0.10.0
libtpu: 0.0.40
codegen_flags: <defaults>
</compile_context>

<pallas_src>
import math

import jax
import jax.numpy as jnp
from jax.experimental import pallas as pl
from jax.experimental.pallas import tpu as pltpu


def _make_mha_kernel(num_heads, head_dim, mm_dtype, need_weights):
    H, Dh = num_heads, head_dim
    inv_h = 1.0 / float(H)

    def kernel(q_ref, k_ref, v_ref, mask_ref, *outs):
        # q_ref: (1, bl, E)   -- E = H * Dh, lane-dense, already mm_dtype
        # k_ref: (1, E, S)    -- pre-transposed in the wrapper
        # v_ref: (1, S, E)
        # mask_ref: (bl, S)   -- additive float mask (f32)
        if need_weights:
            o_ref, w_ref, w_acc = outs
        else:
            (o_ref,) = outs

        mask = mask_ref[...]                              # (bl, S) f32

        for h in range(H):                                # static unrolled
            lo = h * Dh
            qh = q_ref[0, :, lo:lo + Dh]                  # (bl, Dh)
            kh = k_ref[0, lo:lo + Dh, :]                  # (Dh, S) plain NN

            # scores in f32 (MXU accumulates f32); scale folded into Wq
            s = jnp.dot(qh, kh, preferred_element_type=jnp.float32) + mask

            # numerically-stable softmax, stats kept in f32 (v5e-safe)
            m = jnp.max(s, axis=-1, keepdims=True)
            e = jnp.exp(s - m)
            denom = jnp.sum(e, axis=-1, keepdims=True)
            p = e * pl.reciprocal(denom, approx=True)     # EUP vrcp

            if need_weights:
                # ref-resident accumulation: p dies right after the add
                if h == 0:
                    w_acc[...] = p
                else:
                    w_acc[...] += p

            oh = jnp.dot(p.astype(mm_dtype), v_ref[0, :, lo:lo + Dh],
                         preferred_element_type=jnp.float32)
            # store straight into the output block's lane slice: no concat,
            # no per-head partials kept live across the loop
            o_ref[0, :, lo:lo + Dh] = oh.astype(o_ref.dtype)

        if need_weights:
            w_ref[0] = (w_acc[...] * inv_h).astype(w_ref.dtype)

    return kernel


def pallas_mha_core(q, kt, v, attn_mask, num_heads, *, block_l=128,
                    need_weights=True, weights_dtype=jnp.float32,
                    vmem_limit_bytes=None):
    """q: (N, L, E) mm_dtype, kt: (N, E, S) mm_dtype, v: (N, S, E) mm_dtype,
    attn_mask: (L, S) f32 additive.

    Returns (attn (N, L, E) in q.dtype, head-averaged weights (N, L, S) in
    weights_dtype or None if need_weights=False)."""
    N, L, E = q.shape
    S = kt.shape[2]
    Dh = E // num_heads
    mm_dtype = q.dtype

    # query-block tile: per-generation knob; must be a multiple of 8 or == L
    bl = min(block_l, L)
    if bl != L and bl % 8 != 0:
        bl = max(8, (bl // 8) * 8)
    grid = (N, pl.cdiv(L, bl))

    kernel = _make_mha_kernel(num_heads, Dh, mm_dtype, need_weights)

    in_specs = [
        pl.BlockSpec((1, bl, E), lambda n, l: (n, l, 0)),   # q
        pl.BlockSpec((1, E, S), lambda n, l: (n, 0, 0)),    # k^T
        pl.BlockSpec((1, S, E), lambda n, l: (n, 0, 0)),    # v
        pl.BlockSpec((bl, S), lambda n, l: (l, 0)),         # mask
    ]
    out_shape = [jax.ShapeDtypeStruct((N, L, E), q.dtype)]
    out_specs = [pl.BlockSpec((1, bl, E), lambda n, l: (n, l, 0))]
    scratch = []
    if need_weights:
        out_shape.append(jax.ShapeDtypeStruct((N, L, S), weights_dtype))
        out_specs.append(pl.BlockSpec((1, bl, S), lambda n, l: (n, l, 0)))
        scratch.append(pltpu.VMEM((bl, S), jnp.float32))    # weight accum

    outs = pl.pallas_call(
        kernel,
        out_shape=tuple(out_shape),
        grid_spec=pltpu.PrefetchScalarGridSpec(
            num_scalar_prefetch=0,
            grid=grid,
            in_specs=in_specs,
            out_specs=out_specs,
            scratch_shapes=scratch,
        ),
        compiler_params=pltpu.CompilerParams(
            dimension_semantics=("parallel", "parallel"),
            vmem_limit_bytes=vmem_limit_bytes),
    )(q, kt, v, attn_mask)

    if need_weights:
        return outs[0], outs[1]
    return outs[0], None


def multihead_attention(query, key, value, attn_mask, params, num_heads, *,
                        mm_dtype=jnp.bfloat16, block_l=128,
                        need_weights=True, weights_dtype=jnp.float32,
                        vmem_limit_bytes=None):
    """Reproduces torch.nn.MultiheadAttention forward (batch_first=False).

    query: (L, N, E); key/value: (S, N, E); attn_mask: (L, S) additive float.
    Returns (attn_output (L, N, E) f32, attn_weights (N, L, S) head-averaged
    in weights_dtype, or None when need_weights=False).
    """
    L, N, E = query.shape
    H = num_heads
    Dh = E // H
    scale = 1.0 / math.sqrt(Dh)

    in_w = params["in_proj_weight"]    # (3E, E)
    in_b = params["in_proj_bias"]      # (3E,)
    out_w = params["out_proj_weight"]  # (E, E)
    out_b = params["out_proj_bias"]    # (E,)

    wq, wk, wv = in_w[:E], in_w[E:2 * E], in_w[2 * E:]
    bq, bk, bv = in_b[:E], in_b[E:2 * E], in_b[2 * E:]

    # Fold the 1/sqrt(Dh) scale into the q projection (no per-score multiply).
    wq = wq * scale
    bq = bq * scale

    # Input projections emitted directly in the layouts the kernel wants:
    #   q -> (N, L, E), k -> (N, E, S) (pre-transposed), v -> (N, S, E);
    # cast to mm_dtype HERE so the pallas_call DMAs the narrow dtype.
    # TODO(synk): optionally fuse these projections into the kernel with
    #             Wq/Wk/Wv held resident in VMEM.
    q = (jnp.einsum("lne,fe->nlf", query, wq) + bq).astype(mm_dtype)
    kt = (jnp.einsum("sne,fe->nfs", key, wk) + bk[:, None]).astype(mm_dtype)
    v = (jnp.einsum("sne,fe->nsf", value, wv) + bv).astype(mm_dtype)
    mask = attn_mask.astype(jnp.float32)

    attn, attn_weights = pallas_mha_core(
        q, kt, v, mask, H, block_l=block_l, need_weights=need_weights,
        weights_dtype=weights_dtype, vmem_limit_bytes=vmem_limit_bytes)

    # Output projection with the (N,L,E)->(L,N,E) reorder folded in.
    attn_output = (jnp.einsum("nle,fe->lnf", attn.astype(jnp.float32), out_w)
                   + out_b)                                     # (L, N, E)
    return attn_output, attn_weights


def init_params(key, embed_dim):
    k1, k2, _ = jax.random.split(key, 3)
    bound = 1.0 / math.sqrt(embed_dim)
    in_proj_weight = jax.random.uniform(
        k1, (3 * embed_dim, embed_dim), jnp.float32, -bound, bound)
    in_proj_bias = jnp.zeros((3 * embed_dim,), jnp.float32)
    out_proj_weight = jax.random.uniform(
        k2, (embed_dim, embed_dim), jnp.float32, -bound, bound)
    out_proj_bias = jnp.zeros((embed_dim,), jnp.float32)
    return {
        "in_proj_weight": in_proj_weight,
        "in_proj_bias": in_proj_bias,
        "out_proj_weight": out_proj_weight,
        "out_proj_bias": out_proj_bias,
    }


if __name__ == "__main__":
    # small shapes: seq L=S=8, batch N=2, embed_dim E=32, heads H=4 (Dh=8)
    L, S, N, E, H = 8, 8, 2, 32, 4

    root = jax.random.PRNGKey(0)
    kp, kq, kk, kv, km = jax.random.split(root, 5)

    params = init_params(kp, E)
    query = jax.random.normal(kq, (L, N, E), jnp.float32)
    key_ = jax.random.normal(kk, (S, N, E), jnp.float32)
    value = jax.random.normal(kv, (S, N, E), jnp.float32)
    attn_mask = 0.1 * jax.random.normal(km, (L, S), jnp.float32)  # additive

    # plain-JAX reference of the full MHA forward
    def ref_mha(query, key_, value, attn_mask, params, H):
        Lq, Nq, Eq = query.shape
        Dh = Eq // H
        in_w, in_b = params["in_proj_weight"], params["in_proj_bias"]
        q = query @ in_w[:Eq].T + in_b[:Eq]
        k = key_ @ in_w[Eq:2 * Eq].T + in_b[Eq:2 * Eq]
        v = value @ in_w[2 * Eq:].T + in_b[2 * Eq:]
        q = q.reshape(Lq, Nq * H, Dh).transpose(1, 0, 2)
        k = k.reshape(-1, Nq * H, Dh).transpose(1, 0, 2)
        v = v.reshape(-1, Nq * H, Dh).transpose(1, 0, 2)
        s = jnp.einsum("bld,bsd->bls", q, k) / math.sqrt(Dh) + attn_mask[None]
        p = jax.nn.softmax(s, axis=-1)
        o = jnp.einsum("bls,bsd->bld", p, v)
        o = o.transpose(1, 0, 2).reshape(Lq, Nq, Eq)
        o = o @ params["out_proj_weight"].T + params["out_proj_bias"]
        return o, p.reshape(Nq, H, Lq, -1).mean(axis=1)

    ref_out, ref_w = ref_mha(query, key_, value, attn_mask, params, H)

    # 1) f32 path -- tight tolerances (only deviation is the EUP approx recip)
    out_f32, w_f32 = multihead_attention(query, key_, value, attn_mask,
                                         params, num_heads=H,
                                         mm_dtype=jnp.float32)
    jax.block_until_ready((out_f32, w_f32))
    assert jnp.allclose(out_f32, ref_out, atol=2e-3, rtol=2e-3)
    assert jnp.allclose(w_f32, ref_w, atol=1e-3, rtol=1e-3)

    # 2) bf16 fast path (MXU-native on v6e/v7x): matmul inputs bf16, softmax
    #    stats stay f32 -- looser tolerance
    out_bf, w_bf = multihead_attention(query, key_, value, attn_mask,
                                       params, num_heads=H,
                                       mm_dtype=jnp.bfloat16)
    jax.block_until_ready((out_bf, w_bf))
    assert jnp.allclose(out_bf, ref_out, atol=5e-2, rtol=5e-2)
    assert jnp.allclose(w_bf, ref_w, atol=3e-2, rtol=3e-2)

    # 3) need_weights=False path (skips the (N, L, S) writeback entirely)
    out_nw, w_nw = multihead_attention(query, key_, value, attn_mask,
                                       params, num_heads=H,
                                       mm_dtype=jnp.float32,
                                       need_weights=False)
    jax.block_until_ready(out_nw)
    assert w_nw is None
    assert jnp.allclose(out_nw, out_f32, atol=1e-6, rtol=1e-6)

    print("KERNEL_OK")
</pallas_src>

<mosaic_0001>
module attributes {stable_mosaic.version = 11 : i64} {
  func.func @kernel(%arg0: i32, %arg1: i32, %arg2: memref<1x8x32xf32, #tpu.memory_space<vmem>>, %arg3: memref<1x32x8xf32, #tpu.memory_space<vmem>>, %arg4: memref<1x8x32xf32, #tpu.memory_space<vmem>>, %arg5: memref<8x8xf32, #tpu.memory_space<vmem>>, %arg6: memref<1x8x32xf32, #tpu.memory_space<vmem>>, %arg7: memref<1x8x8xf32, #tpu.memory_space<vmem>>, %arg8: memref<8x8xf32, #tpu.memory_space<vmem>>) attributes {dimension_semantics = [#tpu.dimension_semantics<parallel>, #tpu.dimension_semantics<parallel>], iteration_bounds = array<i64: 2, 1>, scalar_prefetch = 0 : i64, scratch_operands = 1 : i64, tpu.core_type = #tpu.core_type<tc>, window_params = [{transform_indices = @transform_0, window_bounds = array<i64: 1, 8, 32>}, {transform_indices = @transform_1, window_bounds = array<i64: 1, 32, 8>}, {transform_indices = @transform_2, window_bounds = array<i64: 1, 8, 32>}, {transform_indices = @transform_3, window_bounds = array<i64: 8, 8>}, {transform_indices = @transform_4, window_bounds = array<i64: 1, 8, 32>}, {transform_indices = @transform_5, window_bounds = array<i64: 1, 8, 8>}]} {
    %c0 = arith.constant 0 : index
    %c0_0 = arith.constant 0 : index
    %0 = vector.load %arg5[%c0, %c0_0] : memref<8x8xf32, #tpu.memory_space<vmem>>, vector<8x8xf32>
    %c0_1 = arith.constant 0 : index
    %c0_2 = arith.constant 0 : index
    %c0_3 = arith.constant 0 : index
    %1 = vector.load %arg2[%c0_1, %c0_2, %c0_3] : memref<1x8x32xf32, #tpu.memory_space<vmem>>, vector<1x8x8xf32>
    %2 = vector.shape_cast %1 : vector<1x8x8xf32> to vector<8x8xf32>
    %c0_4 = arith.constant 0 : index
    %c0_5 = arith.constant 0 : index
    %c0_6 = arith.constant 0 : index
    %3 = vector.load %arg3[%c0_4, %c0_5, %c0_6] : memref<1x32x8xf32, #tpu.memory_space<vmem>>, vector<1x8x8xf32>
    %4 = vector.shape_cast %3 : vector<1x8x8xf32> to vector<8x8xf32>
    %cst = arith.constant dense<0.000000e+00> : vector<8x8xf32>
    %5 = tpu.matmul %2, %4, %cst {dimension_numbers = #tpu.dot_dimension_numbers<[1], [0], [0], [1], [0, 0, 1, 1], [], []>} : vector<8x8xf32>, vector<8x8xf32>, vector<8x8xf32> -> vector<8x8xf32>
    %6 = arith.addf %5, %0 : vector<8x8xf32>
    %cst_7 = arith.constant dense<0xFF800000> : vector<8xf32>
    %7 = vector.multi_reduction <maximumf>, %6, %cst_7 [1] : vector<8x8xf32> to vector<8xf32>
    %8 = vector.shape_cast %7 : vector<8xf32> to vector<8x1xf32>
    %9 = vector.broadcast %8 : vector<8x1xf32> to vector<8x8xf32>
    %10 = arith.subf %6, %9 : vector<8x8xf32>
    %11 = math.exp %10 : vector<8x8xf32>
    %cst_8 = arith.constant dense<0.000000e+00> : vector<8xf32>
    %12 = vector.multi_reduction <add>, %11, %cst_8 [1] : vector<8x8xf32> to vector<8xf32>
    %13 = vector.shape_cast %12 : vector<8xf32> to vector<8x1xf32>
    %14 = tpu.reciprocal %13 {approx = true} : vector<8x1xf32> -> vector<8x1xf32>
    %15 = vector.broadcast %14 : vector<8x1xf32> to vector<8x8xf32>
    %16 = arith.mulf %11, %15 : vector<8x8xf32>
    %c0_9 = arith.constant 0 : index
    %c0_10 = arith.constant 0 : index
    %17 = vector.load %arg8[%c0_9, %c0_10] : memref<8x8xf32, #tpu.memory_space<vmem>>, vector<8x8xf32>
    tpu.vector_store %arg8[%c0_9, %c0_10], %16 {strides = array<i32>} : memref<8x8xf32, #tpu.memory_space<vmem>>, vector<8x8xf32>,
    %c0_11 = arith.constant 0 : index
    %c0_12 = arith.constant 0 : index
    %c0_13 = arith.constant 0 : index
    %18 = vector.load %arg4[%c0_11, %c0_12, %c0_13] : memref<1x8x32xf32, #tpu.memory_space<vmem>>, vector<1x8x8xf32>
    %19 = vector.shape_cast %18 : vector<1x8x8xf32> to vector<8x8xf32>
    %cst_14 = arith.constant dense<0.000000e+00> : vector<8x8xf32>
    %20 = tpu.matmul %16, %19, %cst_14 {dimension_numbers = #tpu.dot_dimension_numbers<[1], [0], [0], [1], [0, 0, 1, 1], [], []>} : vector<8x8xf32>, vector<8x8xf32>, vector<8x8xf32> -> vector<8x8xf32>
    %c0_15 = arith.constant 0 : index
    %c0_16 = arith.constant 0 : index
    %c0_17 = arith.constant 0 : index
    %21 = vector.load %arg6[%c0_15, %c0_16, %c0_17] : memref<1x8x32xf32, #tpu.memory_space<vmem>>, vector<1x8x8xf32>
    %22 = vector.shape_cast %21 : vector<1x8x8xf32> to vector<8x8xf32>
    %23 = vector.shape_cast %20 : vector<8x8xf32> to vector<1x8x8xf32>
    tpu.vector_store %arg6[%c0_15, %c0_16, %c0_17], %23 {strides = array<i32>} : memref<1x8x32xf32, #tpu.memory_space<vmem>>, vector<1x8x8xf32>,
    %c0_18 = arith.constant 0 : index
    %c0_19 = arith.constant 0 : index
    %c8 = arith.constant 8 : index
    %24 = vector.load %arg2[%c0_18, %c0_19, %c8] : memref<1x8x32xf32, #tpu.memory_space<vmem>>, vector<1x8x8xf32>
    %25 = vector.shape_cast %24 : vector<1x8x8xf32> to vector<8x8xf32>
    %c0_20 = arith.constant 0 : index
    %c8_21 = arith.constant 8 : index
    %c0_22 = arith.constant 0 : index
    %26 = vector.load %arg3[%c0_20, %c8_21, %c0_22] : memref<1x32x8xf32, #tpu.memory_space<vmem>>, vector<1x8x8xf32>
    %27 = vector.shape_cast %26 : vector<1x8x8xf32> to vector<8x8xf32>
    %cst_23 = arith.constant dense<0.000000e+00> : vector<8x8xf32>
    %28 = tpu.matmul %25, %27, %cst_23 {dimension_numbers = #tpu.dot_dimension_numbers<[1], [0], [0], [1], [0, 0, 1, 1], [], []>} : vector<8x8xf32>, vector<8x8xf32>, vector<8x8xf32> -> vector<8x8xf32>
    %29 = arith.addf %28, %0 : vector<8x8xf32>
    %cst_24 = arith.constant dense<0xFF800000> : vector<8xf32>
    %30 = vector.multi_reduction <maximumf>, %29, %cst_24 [1] : vector<8x8xf32> to vector<8xf32>
    %31 = vector.shape_cast %30 : vector<8xf32> to vector<8x1xf32>
    %32 = vector.broadcast %31 : vector<8x1xf32> to vector<8x8xf32>
    %33 = arith.subf %29, %32 : vector<8x8xf32>
    %34 = math.exp %33 : vector<8x8xf32>
    %cst_25 = arith.constant dense<0.000000e+00> : vector<8xf32>
    %35 = vector.multi_reduction <add>, %34, %cst_25 [1] : vector<8x8xf32> to vector<8xf32>
    %36 = vector.shape_cast %35 : vector<8xf32> to vector<8x1xf32>
    %37 = tpu.reciprocal %36 {approx = true} : vector<8x1xf32> -> vector<8x1xf32>
    %38 = vector.broadcast %37 : vector<8x1xf32> to vector<8x8xf32>
    %39 = arith.mulf %34, %38 : vector<8x8xf32>
    %c0_26 = arith.constant 0 : index
    %c0_27 = arith.constant 0 : index
    %40 = vector.load %arg8[%c0_26, %c0_27] : memref<8x8xf32, #tpu.memory_space<vmem>>, vector<8x8xf32>
    %41 = arith.addf %40, %39 : vector<8x8xf32>
    %c0_28 = arith.constant 0 : index
    %c0_29 = arith.constant 0 : index
    %42 = vector.load %arg8[%c0_28, %c0_29] : memref<8x8xf32, #tpu.memory_space<vmem>>, vector<8x8xf32>
    tpu.vector_store %arg8[%c0_28, %c0_29], %41 {strides = array<i32>} : memref<8x8xf32, #tpu.memory_space<vmem>>, vector<8x8xf32>,
    %c0_30 = arith.constant 0 : index
    %c0_31 = arith.constant 0 : index
    %c8_32 = arith.constant 8 : index
    %43 = vector.load %arg4[%c0_30, %c0_31, %c8_32] : memref<1x8x32xf32, #tpu.memory_space<vmem>>, vector<1x8x8xf32>
    %44 = vector.shape_cast %43 : vector<1x8x8xf32> to vector<8x8xf32>
    %cst_33 = arith.constant dense<0.000000e+00> : vector<8x8xf32>
    %45 = tpu.matmul %39, %44, %cst_33 {dimension_numbers = #tpu.dot_dimension_numbers<[1], [0], [0], [1], [0, 0, 1, 1], [], []>} : vector<8x8xf32>, vector<8x8xf32>, vector<8x8xf32> -> vector<8x8xf32>
    %c0_34 = arith.constant 0 : index
    %c0_35 = arith.constant 0 : index
    %c8_36 = arith.constant 8 : index
    %46 = vector.load %arg6[%c0_34, %c0_35, %c8_36] : memref<1x8x32xf32, #tpu.memory_space<vmem>>, vector<1x8x8xf32>
    %47 = vector.shape_cast %46 : vector<1x8x8xf32> to vector<8x8xf32>
    %48 = vector.shape_cast %45 : vector<8x8xf32> to vector<1x8x8xf32>
    tpu.vector_store %arg6[%c0_34, %c0_35, %c8_36], %48 {strides = array<i32>} : memref<1x8x32xf32, #tpu.memory_space<vmem>>, vector<1x8x8xf32>,
    %c0_37 = arith.constant 0 : index
    %c0_38 = arith.constant 0 : index
    %c16 = arith.constant 16 : index
    %49 = vector.load %arg2[%c0_37, %c0_38, %c16] : memref<1x8x32xf32, #tpu.memory_space<vmem>>, vector<1x8x8xf32>
    %50 = vector.shape_cast %49 : vector<1x8x8xf32> to vector<8x8xf32>
    %c0_39 = arith.constant 0 : index
    %c16_40 = arith.constant 16 : index
    %c0_41 = arith.constant 0 : index
    %51 = vector.load %arg3[%c0_39, %c16_40, %c0_41] : memref<1x32x8xf32, #tpu.memory_space<vmem>>, vector<1x8x8xf32>
    %52 = vector.shape_cast %51 : vector<1x8x8xf32> to vector<8x8xf32>
    %cst_42 = arith.constant dense<0.000000e+00> : vector<8x8xf32>
    %53 = tpu.matmul %50, %52, %cst_42 {dimension_numbers = #tpu.dot_dimension_numbers<[1], [0], [0], [1], [0, 0, 1, 1], [], []>} : vector<8x8xf32>, vector<8x8xf32>, vector<8x8xf32> -> vector<8x8xf32>
    %54 = arith.addf %53, %0 : vector<8x8xf32>
    %cst_43 = arith.constant dense<0xFF800000> : vector<8xf32>
    %55 = vector.multi_reduction <maximumf>, %54, %cst_43 [1] : vector<8x8xf32> to vector<8xf32>
    %56 = vector.shape_cast %55 : vector<8xf32> to vector<8x1xf32>
    %57 = vector.broadcast %56 : vector<8x1xf32> to vector<8x8xf32>
    %58 = arith.subf %54, %57 : vector<8x8xf32>
    %59 = math.exp %58 : vector<8x8xf32>
    %cst_44 = arith.constant dense<0.000000e+00> : vector<8xf32>
    %60 = vector.multi_reduction <add>, %59, %cst_44 [1] : vector<8x8xf32> to vector<8xf32>
    %61 = vector.shape_cast %60 : vector<8xf32> to vector<8x1xf32>
    %62 = tpu.reciprocal %61 {approx = true} : vector<8x1xf32> -> vector<8x1xf32>
    %63 = vector.broadcast %62 : vector<8x1xf32> to vector<8x8xf32>
    %64 = arith.mulf %59, %63 : vector<8x8xf32>
    %c0_45 = arith.constant 0 : index
    %c0_46 = arith.constant 0 : index
    %65 = vector.load %arg8[%c0_45, %c0_46] : memref<8x8xf32, #tpu.memory_space<vmem>>, vector<8x8xf32>
    %66 = arith.addf %65, %64 : vector<8x8xf32>
    %c0_47 = arith.constant 0 : index
    %c0_48 = arith.constant 0 : index
    %67 = vector.load %arg8[%c0_47, %c0_48] : memref<8x8xf32, #tpu.memory_space<vmem>>, vector<8x8xf32>
    tpu.vector_store %arg8[%c0_47, %c0_48], %66 {strides = array<i32>} : memref<8x8xf32, #tpu.memory_space<vmem>>, vector<8x8xf32>,
    %c0_49 = arith.constant 0 : index
    %c0_50 = arith.constant 0 : index
    %c16_51 = arith.constant 16 : index
    %68 = vector.load %arg4[%c0_49, %c0_50, %c16_51] : memref<1x8x32xf32, #tpu.memory_space<vmem>>, vector<1x8x8xf32>
    %69 = vector.shape_cast %68 : vector<1x8x8xf32> to vector<8x8xf32>
    %cst_52 = arith.constant dense<0.000000e+00> : vector<8x8xf32>
    %70 = tpu.matmul %64, %69, %cst_52 {dimension_numbers = #tpu.dot_dimension_numbers<[1], [0], [0], [1], [0, 0, 1, 1], [], []>} : vector<8x8xf32>, vector<8x8xf32>, vector<8x8xf32> -> vector<8x8xf32>
    %c0_53 = arith.constant 0 : index
    %c0_54 = arith.constant 0 : index
    %c16_55 = arith.constant 16 : index
    %71 = vector.load %arg6[%c0_53, %c0_54, %c16_55] : memref<1x8x32xf32, #tpu.memory_space<vmem>>, vector<1x8x8xf32>
    %72 = vector.shape_cast %71 : vector<1x8x8xf32> to vector<8x8xf32>
    %73 = vector.shape_cast %70 : vector<8x8xf32> to vector<1x8x8xf32>
    tpu.vector_store %arg6[%c0_53, %c0_54, %c16_55], %73 {strides = array<i32>} : memref<1x8x32xf32, #tpu.memory_space<vmem>>, vector<1x8x8xf32>,
    %c0_56 = arith.constant 0 : index
    %c0_57 = arith.constant 0 : index
    %c24 = arith.constant 24 : index
    %74 = vector.load %arg2[%c0_56, %c0_57, %c24] : memref<1x8x32xf32, #tpu.memory_space<vmem>>, vector<1x8x8xf32>
    %75 = vector.shape_cast %74 : vector<1x8x8xf32> to vector<8x8xf32>
    %c0_58 = arith.constant 0 : index
    %c24_59 = arith.constant 24 : index
    %c0_60 = arith.constant 0 : index
    %76 = vector.load %arg3[%c0_58, %c24_59, %c0_60] : memref<1x32x8xf32, #tpu.memory_space<vmem>>, vector<1x8x8xf32>
    %77 = vector.shape_cast %76 : vector<1x8x8xf32> to vector<8x8xf32>
    %cst_61 = arith.constant dense<0.000000e+00> : vector<8x8xf32>
    %78 = tpu.matmul %75, %77, %cst_61 {dimension_numbers = #tpu.dot_dimension_numbers<[1], [0], [0], [1], [0, 0, 1, 1], [], []>} : vector<8x8xf32>, vector<8x8xf32>, vector<8x8xf32> -> vector<8x8xf32>
    %79 = arith.addf %78, %0 : vector<8x8xf32>
    %cst_62 = arith.constant dense<0xFF800000> : vector<8xf32>
    %80 = vector.multi_reduction <maximumf>, %79, %cst_62 [1] : vector<8x8xf32> to vector<8xf32>
    %81 = vector.shape_cast %80 : vector<8xf32> to vector<8x1xf32>
    %82 = vector.broadcast %81 : vector<8x1xf32> to vector<8x8xf32>
    %83 = arith.subf %79, %82 : vector<8x8xf32>
    %84 = math.exp %83 : vector<8x8xf32>
    %cst_63 = arith.constant dense<0.000000e+00> : vector<8xf32>
    %85 = vector.multi_reduction <add>, %84, %cst_63 [1] : vector<8x8xf32> to vector<8xf32>
    %86 = vector.shape_cast %85 : vector<8xf32> to vector<8x1xf32>
    %87 = tpu.reciprocal %86 {approx = true} : vector<8x1xf32> -> vector<8x1xf32>
    %88 = vector.broadcast %87 : vector<8x1xf32> to vector<8x8xf32>
    %89 = arith.mulf %84, %88 : vector<8x8xf32>
    %c0_64 = arith.constant 0 : index
    %c0_65 = arith.constant 0 : index
    %90 = vector.load %arg8[%c0_64, %c0_65] : memref<8x8xf32, #tpu.memory_space<vmem>>, vector<8x8xf32>
    %91 = arith.addf %90, %89 : vector<8x8xf32>
    %c0_66 = arith.constant 0 : index
    %c0_67 = arith.constant 0 : index
    %92 = vector.load %arg8[%c0_66, %c0_67] : memref<8x8xf32, #tpu.memory_space<vmem>>, vector<8x8xf32>
    tpu.vector_store %arg8[%c0_66, %c0_67], %91 {strides = array<i32>} : memref<8x8xf32, #tpu.memory_space<vmem>>, vector<8x8xf32>,
    %c0_68 = arith.constant 0 : index
    %c0_69 = arith.constant 0 : index
    %c24_70 = arith.constant 24 : index
    %93 = vector.load %arg4[%c0_68, %c0_69, %c24_70] : memref<1x8x32xf32, #tpu.memory_space<vmem>>, vector<1x8x8xf32>
    %94 = vector.shape_cast %93 : vector<1x8x8xf32> to vector<8x8xf32>
    %cst_71 = arith.constant dense<0.000000e+00> : vector<8x8xf32>
    %95 = tpu.matmul %89, %94, %cst_71 {dimension_numbers = #tpu.dot_dimension_numbers<[1], [0], [0], [1], [0, 0, 1, 1], [], []>} : vector<8x8xf32>, vector<8x8xf32>, vector<8x8xf32> -> vector<8x8xf32>
    %c0_72 = arith.constant 0 : index
    %c0_73 = arith.constant 0 : index
    %c24_74 = arith.constant 24 : index
    %96 = vector.load %arg6[%c0_72, %c0_73, %c24_74] : memref<1x8x32xf32, #tpu.memory_space<vmem>>, vector<1x8x8xf32>
    %97 = vector.shape_cast %96 : vector<1x8x8xf32> to vector<8x8xf32>
    %98 = vector.shape_cast %95 : vector<8x8xf32> to vector<1x8x8xf32>
    tpu.vector_store %arg6[%c0_72, %c0_73, %c24_74], %98 {strides = array<i32>} : memref<1x8x32xf32, #tpu.memory_space<vmem>>, vector<1x8x8xf32>,
    %c0_75 = arith.constant 0 : index
    %c0_76 = arith.constant 0 : index
    %99 = vector.load %arg8[%c0_75, %c0_76] : memref<8x8xf32, #tpu.memory_space<vmem>>, vector<8x8xf32>
    %cst_77 = arith.constant 2.500000e-01 : f32
    %100 = vector.broadcast %cst_77 : f32 to vector<8x8xf32>
    %101 = arith.mulf %99, %100 : vector<8x8xf32>
    %c0_78 = arith.constant 0 : index
    %c0_79 = arith.constant 0 : index
    %c0_80 = arith.constant 0 : index
    %102 = vector.load %arg7[%c0_78, %c0_79, %c0_80] : memref<1x8x8xf32, #tpu.memory_space<vmem>>, vector<1x8x8xf32>
    %103 = vector.shape_cast %102 : vector<1x8x8xf32> to vector<8x8xf32>
    %104 = vector.shape_cast %101 : vector<8x8xf32> to vector<1x8x8xf32>
    tpu.vector_store %arg7[%c0_78, %c0_79, %c0_80], %104 {strides = array<i32>} : memref<1x8x8xf32, #tpu.memory_space<vmem>>, vector<1x8x8xf32>,
    return
  }
  func.func @transform_0(%arg0: i32, %arg1: i32) -> (i32, i32, i32) {
    %c0_i32 = arith.constant 0 : i32
    %c0_i32_0 = arith.constant 0 : i32
    return %arg0, %arg1, %c0_i32 : i32, i32, i32
  }
  func.func @transform_1(%arg0: i32, %arg1: i32) -> (i32, i32, i32) {
    %c0_i32 = arith.constant 0 : i32
    %c0_i32_0 = arith.constant 0 : i32
    %c0_i32_1 = arith.constant 0 : i32
    return %arg0, %c0_i32, %c0_i32_0 : i32, i32, i32
  }
  func.func @transform_2(%arg0: i32, %arg1: i32) -> (i32, i32, i32) {
    %c0_i32 = arith.constant 0 : i32
    %c0_i32_0 = arith.constant 0 : i32
    %c0_i32_1 = arith.constant 0 : i32
    return %arg0, %c0_i32, %c0_i32_0 : i32, i32, i32
  }
  func.func @transform_3(%arg0: i32, %arg1: i32) -> (i32, i32) {
    %c0_i32 = arith.constant 0 : i32
    %c0_i32_0 = arith.constant 0 : i32
    return %arg1, %c0_i32 : i32, i32
  }
  func.func @transform_4(%arg0: i32, %arg1: i32) -> (i32, i32, i32) {
    %c0_i32 = arith.constant 0 : i32
    %c0_i32_0 = arith.constant 0 : i32
    return %arg0, %arg1, %c0_i32 : i32, i32, i32
  }
  func.func @transform_5(%arg0: i32, %arg1: i32) -> (i32, i32, i32) {
    %c0_i32 = arith.constant 0 : i32
    %c0_i32_0 = arith.constant 0 : i32
    return %arg0, %arg1, %c0_i32 : i32, i32, i32
  }
}

</mosaic_0001>

<llo_original>
// kernel: tpu_custom_call.1
$region0: #{tpu_custom_call.1}
  #allocation0 [shape = 'u32[]', space=smem, size = 0x4, offset = 0x4, fixed_abs, tag = 'smem constant byte address 0x4 - core index']
  #allocation1 [shape = 'u32[144,128]{1,0:T(1,128)}', space=vmem, size = 0x12000, scoped, tag = 'internal scratch']
  #allocation2 [shape = 'f32[8,8]{1,0:T(8,128)}', space=vmem, size = 0x1000, scoped, tag = 'scratch operand']
  %s0 = inlined_call_operand.vmem [shape: f32[2,8,32], index: 0, kind: input, shape index: {}]
  %s1 = inlined_call_operand.vmem [shape: f32[2,32,8], index: 1, kind: input, shape index: {}]
  %s2 = inlined_call_operand.vmem [shape: f32[2,8,32], index: 2, kind: input, shape index: {}]
  %s3 = inlined_call_operand.vmem [shape: f32[8,8], index: 3, kind: input, shape index: {}]
  %s4 = inlined_call_operand.hbm [shape: f32[2,8,32], index: 4, kind: output, shape index: {0}]
  %s5 = inlined_call_operand.hbm [shape: f32[2,8,8], index: 5, kind: output, shape index: {1}]
  %6 = xla_tuple %s4, %s5
  %s7 = sld [smem:[#allocation0]]
  $region57: #{tpu_custom_call.1} parent=0
    _
  %s9 = ssub.s32 1, %s7
  %s10 = scalar_select 0, %s9, %s7
  $region1: #{tpu_custom_call.1} parent=0
    #allocation3 [shape = 'u8[8192]{0}', space=vmem, size = 0x2000, scoped, tag = 'output window, operand 0']
    #allocation4 [shape = 's32[2]{0}', space=sflag, size = 0x8, scoped, tag = 'scoped memory for tpu_custom_call.1']
    #allocation5 [shape = 'u8[8192]{0}', space=vmem, size = 0x2000, scoped, tag = 'output window, operand 1']
    #allocation6 [shape = 's32[2]{0}', space=sflag, size = 0x8, scoped, tag = 'scoped memory for tpu_custom_call.1']
    %11 = vsyncpa [#allocation4], 0
    %s12 = scalar_lea.sflag [#allocation4], 1
    %13 = vsyncpa %s12, 0
    %14 = vsyncpa [#allocation6], 0
    %s15 = scalar_lea.sflag [#allocation6], 1
    %16 = vsyncpa %s15, 0
    loop: start=0, step=1, limit=4
    $region2: #{tpu_custom_call.1} parent=1 // loop_pre_header
      _
    $region3: #{tpu_custom_call.1} parent=1 // loop_header
      %s18 = sphi 0, %s22
      %p19 = scmp.ge.s32.totalorder %s18, 4
      %s25 = sphi 0, %s37
      %s26 = sphi 0, %s33
      %s27 = sphi 0, %s25
      %s28 = sphi 0, %s26
      %s29 = sphi 0, %s27
      %s30 = sphi 0, %s28
      %s42 = sphi 0, %s44
      %s45 = sphi 0, %s42
      %s46 = sphi 0, %s45
      %s62 = sphi 0, %s46
      %s68 = sphi 0, %s70
      %s71 = sphi 0, %s68
      %s72 = sphi 0, %s71
      %s88 = sphi 0, %s72
      %s94 = sphi 0, %s96
      %s97 = sphi 0, %s94
      %s98 = sphi 0, %s97
      %s114 = sphi 0, %s98
      %s120 = sphi 0, %s122
      %s123 = sphi 0, %s120
      %s124 = sphi 0, %s123
      %s140 = sphi 0, %s124
      %s148 = sphi 0, %s150
      %s151 = sphi 0, %s148
      %s152 = sphi 0, %s151
      %s168 = sphi 0, %s152
      %s176 = sphi 0, %s178
      %s179 = sphi 0, %s176
      %s180 = sphi 0, %s179
      %s196 = sphi 0, %s180
    $region4: #{tpu_custom_call.1} parent=1 // loop_header_branch
      %21 = sbr.rel (%p19) target = $region8
    $region5: #{tpu_custom_call.1} parent=1 // loop_body
      %s23 = ssub.s32 %s18, 1
      %s24 = ssub.s32 %s18, 2
      %s31 = sadd.s32 1, %s26
      %p32 = scmp.ge.s32.totalorder %s31, 1
      %s33 = scalar_select %p32, 0, %s31
      %s34 = sadd.s32 1, %s25
      %s35 = scalar_select %p32, %s34, %s25
      %p36 = scmp.ge.s32.totalorder %s35, 2
      %s37 = scalar_select %p36, 0, %s35
      %s38 = ssub.s32 %s25, %s37
      %s39 = ssub.s32 %s26, %s33
      %s40 = sor.u32 %s38, %s39
      %p41 = scmp.eq.s32.totalorder %s40, 0
      %s43 = sadd.s32 %s42, 1
      %s44 = scalar_select %p41, %s42, %s43
      %p47 = pneg %p41
      %p48 = scmp.eq.s32.totalorder %s18, 1
      %p49 = por %p47, %p48
      %p50 = scmp.ne.s32.totalorder %s42, %s45
      %p51 = scmp.eq.s32.totalorder %s18, 0
      %p52 = por %p50, %p51
      %p53 = scmp.ne.s32.totalorder %s42, %s45
      %p54 = scmp.eq.s32.totalorder %s23, 1
      %p55 = por %p53, %p54
      %p56 = scmp.ne.s32.totalorder %s45, %s46
      %p57 = scmp.eq.s32.totalorder %s23, 0
      %p58 = por %p56, %p57
      %p59 = scmp.ne.s32.totalorder %s45, %s46
      %p60 = scmp.eq.s32.totalorder %s24, 1
      %p61 = por %p59, %p60
      %p63 = scmp.ne.s32.totalorder %s46, %s62
      %p64 = scmp.eq.s32.totalorder %s24, 0
      %p65 = por %p63, %p64
      %s66 = ssub.s32 %s25, %s37
      %p67 = scmp.eq.s32.totalorder %s66, 0
      %s69 = sadd.s32 %s68, 1
      %s70 = scalar_select %p67, %s68, %s69
      %p73 = pneg %p67
      %p74 = scmp.eq.s32.totalorder %s18, 1
      %p75 = por %p73, %p74
      %p76 = scmp.ne.s32.totalorder %s68, %s71
      %p77 = scmp.eq.s32.totalorder %s18, 0
      %p78 = por %p76, %p77
      %p79 = scmp.ne.s32.totalorder %s68, %s71
      %p80 = scmp.eq.s32.totalorder %s23, 1
      %p81 = por %p79, %p80
      %p82 = scmp.ne.s32.totalorder %s71, %s72
      %p83 = scmp.eq.s32.totalorder %s23, 0
      %p84 = por %p82, %p83
      %p85 = scmp.ne.s32.totalorder %s71, %s72
      %p86 = scmp.eq.s32.totalorder %s24, 1
      %p87 = por %p85, %p86
      %p89 = scmp.ne.s32.totalorder %s72, %s88
      %p90 = scmp.eq.s32.totalorder %s24, 0
      %p91 = por %p89, %p90
      %s92 = ssub.s32 %s25, %s37
      %p93 = scmp.eq.s32.totalorder %s92, 0
      %s95 = sadd.s32 %s94, 1
      %s96 = scalar_select %p93, %s94, %s95
      %p99 = pneg %p93
      %p100 = scmp.eq.s32.totalorder %s18, 1
      %p101 = por %p99, %p100
      %p102 = scmp.ne.s32.totalorder %s94, %s97
      %p103 = scmp.eq.s32.totalorder %s18, 0
      %p104 = por %p102, %p103
      %p105 = scmp.ne.s32.totalorder %s94, %s97
      %p106 = scmp.eq.s32.totalorder %s23, 1
      %p107 = por %p105, %p106
      %p108 = scmp.ne.s32.totalorder %s97, %s98
      %p109 = scmp.eq.s32.totalorder %s23, 0
      %p110 = por %p108, %p109
      %p111 = scmp.ne.s32.totalorder %s97, %s98
      %p112 = scmp.eq.s32.totalorder %s24, 1
      %p113 = por %p111, %p112
      %p115 = scmp.ne.s32.totalorder %s98, %s114
      %p116 = scmp.eq.s32.totalorder %s24, 0
      %p117 = por %p115, %p116
      %s118 = ssub.s32 %s26, %s33
      %p119 = scmp.eq.s32.totalorder %s118, 0
      %s121 = sadd.s32 %s120, 1
      %s122 = scalar_select %p119, %s120, %s121
      %p125 = pneg %p119
      %p126 = scmp.eq.s32.totalorder %s18, 1
      %p127 = por %p125, %p126
      %p128 = scmp.ne.s32.totalorder %s120, %s123
      %p129 = scmp.eq.s32.totalorder %s18, 0
      %p130 = por %p128, %p129
      %p131 = scmp.ne.s32.totalorder %s120, %s123
      %p132 = scmp.eq.s32.totalorder %s23, 1
      %p133 = por %p131, %p132
      %p134 = scmp.ne.s32.totalorder %s123, %s124
      %p135 = scmp.eq.s32.totalorder %s23, 0
      %p136 = por %p134, %p135
      %p137 = scmp.ne.s32.totalorder %s123, %s124
      %p138 = scmp.eq.s32.totalorder %s24, 1
      %p139 = por %p137, %p138
      %p141 = scmp.ne.s32.totalorder %s124, %s140
      %p142 = scmp.eq.s32.totalorder %s24, 0
      %p143 = por %p141, %p142
      %s144 = ssub.s32 %s25, %s37
      %s145 = ssub.s32 %s26, %s33
      %s146 = sor.u32 %s144, %s145
      %p147 = scmp.eq.s32.totalorder %s146, 0
      %s149 = sadd.s32 %s148, 1
      %s150 = scalar_select %p147, %s148, %s149
      %p153 = pneg %p147
      %p154 = scmp.eq.s32.totalorder %s18, 1
      %p155 = por %p153, %p154
      %p156 = scmp.ne.s32.totalorder %s148, %s151
      %p157 = scmp.eq.s32.totalorder %s18, 0
      %p158 = por %p156, %p157
      %p159 = scmp.ne.s32.totalorder %s148, %s151
      %p160 = scmp.eq.s32.totalorder %s23, 1
      %p161 = por %p159, %p160
      %p162 = scmp.ne.s32.totalorder %s151, %s152
      %p163 = scmp.eq.s32.totalorder %s23, 0
      %p164 = por %p162, %p163
      %p165 = scmp.ne.s32.totalorder %s151, %s152
      %p166 = scmp.eq.s32.totalorder %s24, 1
      %p167 = por %p165, %p166
      %p169 = scmp.ne.s32.totalorder %s152, %s168
      %p170 = scmp.eq.s32.totalorder %s24, 0
      %p171 = por %p169, %p170
      %s172 = ssub.s32 %s25, %s37
      %s173 = ssub.s32 %s26, %s33
      %s174 = sor.u32 %s172, %s173
      %p175 = scmp.eq.s32.totalorder %s174, 0
      %s177 = sadd.s32 %s176, 1
      %s178 = scalar_select %p175, %s176, %s177
      %p181 = pneg %p175
      %p182 = scmp.eq.s32.totalorder %s18, 1
      %p183 = por %p181, %p182
      %p184 = scmp.ne.s32.totalorder %s176, %s179
      %p185 = scmp.eq.s32.totalorder %s18, 0
      %p186 = por %p184, %p185
      %p187 = scmp.ne.s32.totalorder %s176, %s179
      %p188 = scmp.eq.s32.totalorder %s23, 1
      %p189 = por %p187, %p188
      %p190 = scmp.ne.s32.totalorder %s179, %s180
      %p191 = scmp.eq.s32.totalorder %s23, 0
      %p192 = por %p190, %p191
      %p193 = scmp.ne.s32.totalorder %s179, %s180
      %p194 = scmp.eq.s32.totalorder %s24, 1
      %p195 = por %p193, %p194
      %p197 = scmp.ne.s32.totalorder %s180, %s196
      %p198 = scmp.eq.s32.totalorder %s24, 0
      %p199 = por %p197, %p198
      %p200 = scmp.le.s32.totalorder 1, %s18
      %p201 = scmp.lt.s32.totalorder %s18, 3
      %p202 = pnand %p200, %p201
      %p203 = pneg %p202
      // Predicated region
      $region9: #{tpu_custom_call.1} parent=5 // pred_check
        _
      $region10: #{tpu_custom_call.1} parent=5 // pred_check_branch
        %205 = sbr.rel (%p202) target = $region12
      $region11: #{tpu_custom_call.1} parent=5 // pred_region
        %s206 = ssub.s32 %s18, 1
        // Predicated region
        $region13: #{tpu_custom_call.1} parent=11 // pred_check
          %p207 = pneg %p136
        $region14: #{tpu_custom_call.1} parent=11 // pred_check_branch
          %209 = sbr.rel (%p207) target = $region16
        $region15: #{tpu_custom_call.1} parent=11 // pred_region
          %p210 = scmp.lt.s32.totalorder %s28, 0
          %s211 = scalar_select %p210, %s28, 0
          %s212 = smul.addr %s211, 8
          %s213 = scalar_lea.vmem %s3, %s212
        $region16: #{tpu_custom_call.1} parent=11 // pred_fallthru
          _
      $region12: #{tpu_custom_call.1} parent=5 // pred_fallthru
        _
      %p214 = scmp.lt.s32.totalorder %s18, 2
      // Predicated region
      $region17: #{tpu_custom_call.1} parent=5 // pred_check
        %p215 = pneg %p214
      $region18: #{tpu_custom_call.1} parent=5 // pred_check_branch
        %217 = sbr.rel (%p215) target = $region20
      $region19: #{tpu_custom_call.1} parent=5 // pred_region
        // Predicated region
        $region21: #{tpu_custom_call.1} parent=19 // pred_check
          %p218 = pneg %p52
        $region22: #{tpu_custom_call.1} parent=19 // pred_check_branch
          %220 = sbr.rel (%p218) target = $region24
        $region23: #{tpu_custom_call.1} parent=19 // pred_region
          %p221 = scmp.lt.s32.totalorder %s25, 1
          %s222 = scalar_select %p221, %s25, 1
          %p223 = scmp.lt.s32.totalorder %s26, 0
          %s224 = scalar_select %p223, %s26, 0
          %s225 = sadd.s32 %s224, %s222
          %s226 = smul.addr %s225, 8
          %s227 = scalar_lea.vmem %s0, %s226
        $region24: #{tpu_custom_call.1} parent=19 // pred_fallthru
          _
        // Predicated region
        $region25: #{tpu_custom_call.1} parent=19 // pred_check
          %p228 = pneg %p78
        $region26: #{tpu_custom_call.1} parent=19 // pred_check_branch
          %230 = sbr.rel (%p228) target = $region28
        $region27: #{tpu_custom_call.1} parent=19 // pred_region
          %p231 = scmp.lt.s32.totalorder %s25, 1
          %s232 = scalar_select %p231, %s25, 1
          %s233 = smul.addr %s232, 4
          %s234 = smul.addr %s233, 8
          %s235 = scalar_lea.vmem %s1, %s234
        $region28: #{tpu_custom_call.1} parent=19 // pred_fallthru
          _
        // Predicated region
        $region29: #{tpu_custom_call.1} parent=19 // pred_check
          %p236 = pneg %p104
        $region30: #{tpu_custom_call.1} parent=19 // pred_check_branch
          %238 = sbr.rel (%p236) target = $region32
        $region31: #{tpu_custom_call.1} parent=19 // pred_region
          %p239 = scmp.lt.s32.totalorder %s25, 1
          %s240 = scalar_select %p239, %s25, 1
          %s241 = smul.addr %s240, 8
          %s242 = scalar_lea.vmem %s2, %s241
        $region32: #{tpu_custom_call.1} parent=19 // pred_fallthru
          _
      $region20: #{tpu_custom_call.1} parent=5 // pred_fallthru
        _
      %p243 = scmp.le.s32.totalorder 1, %s18
      %p244 = scmp.lt.s32.totalorder %s18, 3
      %p245 = pnand %p243, %p244
      %p246 = pneg %p245
      // Predicated region
      $region33: #{tpu_custom_call.1} parent=5 // pred_check
        _
      $region34: #{tpu_custom_call.1} parent=5 // pred_check_branch
        %248 = sbr.rel (%p245) target = $region36
      $region35: #{tpu_custom_call.1} parent=5 // pred_region
        %s249 = ssub.s32 %s18, 1
        %p250 = scmp.lt.s32.totalorder %s27, 1
        %s251 = scalar_select %p250, %s27, 1
        %p252 = scmp.lt.s32.totalorder %s28, 0
        %s253 = scalar_select %p252, %s28, 0
        %s254 = sadd.s32 %s253, %s251
        %s255 = smul.addr %s254, 8
        %s256 = scalar_lea.vmem %s0, %s255
        %p257 = pneg %p58
        %p258 = pneg %p55
        %p259 = scmp.lt.s32.totalorder %s27, 1
        %s260 = scalar_select %p259, %s27, 1
        %s261 = smul.addr %s260, 4
        %s262 = smul.addr %s261, 8
        %s263 = scalar_lea.vmem %s1, %s262
        %p264 = pneg %p84
        %p265 = pneg %p81
        %p266 = scmp.lt.s32.totalorder %s27, 1
        %s267 = scalar_select %p266, %s27, 1
        %s268 = smul.addr %s267, 8
        %s269 = scalar_lea.vmem %s2, %s268
        %p270 = pneg %p110
        %p271 = pneg %p107
        %p272 = scmp.lt.s32.totalorder %s28, 0
        %s273 = scalar_select %p272, %s28, 0
        %s274 = smul.addr %s273, 8
        %s275 = scalar_lea.vmem %s3, %s274
        %p276 = pneg %p136
        %p277 = pneg %p133
        %p278 = pneg %p164
        %p279 = pneg %p161
        %s280 = sand.u32 %s151, 1
        %s281 = scalar_lea.sflag [#allocation4], %s280
        %s282 = sand.u32 %s151, 1
        %s283 = smul.addr %s282, 8
        %s284 = scalar_lea.vmem [#allocation3], %s283
        %p285 = pneg %p192
        %p286 = pneg %p189
        %s287 = sand.u32 %s179, 1
        %s288 = scalar_lea.sflag [#allocation6], %s287
        %s289 = sand.u32 %s179, 1
        %s290 = smul.addr %s289, 8
        %s291 = scalar_lea.vmem [#allocation5], %s290
        %p292 = scmp.lt.s32.totalorder %s27, 1
        %s293 = scalar_select %p292, %s27, 1
        %p294 = scmp.lt.s32.totalorder %s28, 0
        %s295 = scalar_select %p294, %s28, 0
        %s296 = sadd.s32 %s295, %s293
        %s297 = smul.addr %s296, 8
        %s298 = scalar_lea.vmem %s0, %s297
        %p299 = scmp.lt.s32.totalorder %s27, 1
        %s300 = scalar_select %p299, %s27, 1
        %s301 = smul.addr %s300, 4
        %s302 = smul.addr %s301, 8
        %s303 = scalar_lea.vmem %s1, %s302
        %p304 = scmp.lt.s32.totalorder %s27, 1
        %s305 = scalar_select %p304, %s27, 1
        %s306 = smul.addr %s305, 8
        %s307 = scalar_lea.vmem %s2, %s306
        %p308 = scmp.lt.s32.totalorder %s28, 0
        %s309 = scalar_select %p308, %s28, 0
        %s310 = smul.addr %s309, 8
        %s311 = scalar_lea.vmem %s3, %s310
        %v312 = vld [vmem:[%s311] sm:$0xff]
        %v313 = vld [vmem:[%s298] sm:$0xff]
        %v314 = vld [vmem:[%s303] sm:$0xff]
        %vm315 = vcmask 64512
        %v317 = vsel %vm315, %v313, 0
        %319 = vmatprep.subr.mxu0 0.0
        %320 = vmatpush1.msra.mxu0 %v314
        %321 = vmatprep.subr.mxu0 0.0
        %322 = vmatpush1.msra.mxu0 0.0
        %323 = vmatprep.subr.mxu0 0.0
        %324 = vmatpush1.msra.mxu0 0.0
        %325 = vmatprep.subr.mxu0 0.0
        %326 = vmatpush1.msra.mxu0 0.0
        %327 = vmatprep.subr.mxu0 0.0
        %328 = vmatpush1.msra.mxu0 0.0
        %329 = vmatprep.subr.mxu0 0.0
        %330 = vmatpush1.msra.mxu0 0.0
        %331 = vmatprep.subr.mxu0 0.0
        %332 = vmatpush1.msra.mxu0 0.0
        %333 = vmatprep.subr.mxu0 0.0
        %334 = vmatpush1.msra.mxu0 0.0
        %335 = vmatprep.subr.mxu0 0.0
        %336 = vmatpush1.msra.mxu0 0.0
        %337 = vmatprep.subr.mxu0 0.0
        %338 = vmatpush1.msra.mxu0 0.0
        %339 = vmatprep.subr.mxu0 0.0
        %340 = vmatpush1.msra.mxu0 0.0
        %341 = vmatprep.subr.mxu0 0.0
        %342 = vmatpush1.msra.mxu0 0.0
        %343 = vmatprep.subr.mxu0 0.0
        %344 = vmatpush1.msra.mxu0 0.0
        %345 = vmatprep.subr.mxu0 0.0
        %346 = vmatpush1.msra.mxu0 0.0
        %347 = vmatprep.subr.mxu0 0.0
        %348 = vmatpush1.msra.mxu0 0.0
        %349 = vmatprep.subr.mxu0 0.0
        %350 = vmatpush1.msra.mxu0 0.0
        %351 = vmatprep.subr.mxu0 0.0
        %352 = vmatpush1.msra.mxu0 0.0
        %353 = vmatprep.subr.mxu0 0.0
        %354 = vmatpush1.msra.mxu0 0.0
        %355 = vmatprep.subr.mxu0 0.0
        %356 = vmatpush1.msra.mxu0 0.0
        %357 = vmatprep.subr.mxu0 0.0
        %358 = vmatpush1.msra.mxu0 0.0
        %359 = vmatprep.subr.mxu0 0.0
        %360 = vmatpush1.msra.mxu0 0.0
        %361 = vmatprep.subr.mxu0 0.0
        %362 = vmatpush1.msra.mxu0 0.0
        %363 = vmatprep.subr.mxu0 0.0
        %364 = vmatpush1.msra.mxu0 0.0
        %365 = vmatprep.subr.mxu0 0.0
        %366 = vmatpush1.msra.mxu0 0.0
        %367 = vmatprep.subr.mxu0 0.0
        %368 = vmatpush1.msra.mxu0 0.0
        %369 = vmatprep.subr.mxu0 0.0
        %370 = vmatpush1.msra.mxu0 0.0
        %371 = vmatprep.subr.mxu0 0.0
        %372 = vmatpush1.msra.mxu0 0.0
        %373 = vmatprep.subr.mxu0 0.0
        %374 = vmatpush1.msra.mxu0 0.0
        %375 = vmatprep.subr.mxu0 0.0
        %376 = vmatpush1.msra.mxu0 0.0
        %377 = vmatprep.subr.mxu0 0.0
        %378 = vmatpush1.msra.mxu0 0.0
        %379 = vmatprep.subr.mxu0 0.0
        %380 = vmatpush1.msra.mxu0 0.0
        %381 = vmatprep.subr.mxu0 0.0
        %382 = vmatpush1.msra.mxu0 0.0
        %383 = vmatprep.mubr.f32.mxu0 0.0
        %384 = vmatmul.mubr.f32.gmra.mrb[0].mxu0 %v317
        %v385 = vpop.f32.mrb[0].mxu0
        %v386 = vadd.f32 %v312, %v385
        %v387 = vpop.f32.mrb[0].mxu0
        %388 = vdwg.mxu0
        %v389 = vsel %vm315, %v386, -inf
        %390 = vmax.xlane.f32.xlu0 %v389
        %v391 = vpop.xlane.xlu0 %390
        %v392 = vsub.f32 %v386, %v391
        %v393 = vmul.f32 %v392, 1.442695
        %v394 = vpow.pop %v393
        %v395 = vsel %vm315, %v394, 0.0
        %396 = vadd.xlane.f32.xlu0 %v395
        %v397 = vpop.xlane.xlu0 %396
        %v398 = vrcp.pop %v397
        %v399 = vmul.f32 %v394, %v398
        %400 = vst.msk [vmem:[#allocation2] sm:$0xff] %vm315, %v399
        %v401 = vld [vmem:[%s307] sm:$0xff]
        %v403 = vsel %vm315, %v399, 0
        %405 = vmatprep.subr.mxu0 0.0
        %406 = vmatpush1.msra.mxu0 %v401
        %407 = vmatprep.subr.mxu0 0.0
        %408 = vmatpush1.msra.mxu0 0.0
        %409 = vmatprep.subr.mxu0 0.0
        %410 = vmatpush1.msra.mxu0 0.0
        %411 = vmatprep.subr.mxu0 0.0
        %412 = vmatpush1.msra.mxu0 0.0
        %413 = vmatprep.subr.mxu0 0.0
        %414 = vmatpush1.msra.mxu0 0.0
        %415 = vmatprep.subr.mxu0 0.0
        %416 = vmatpush1.msra.mxu0 0.0
        %417 = vmatprep.subr.mxu0 0.0
        %418 = vmatpush1.msra.mxu0 0.0
        %419 = vmatprep.subr.mxu0 0.0
        %420 = vmatpush1.msra.mxu0 0.0
        %421 = vmatprep.subr.mxu0 0.0
        %422 = vmatpush1.msra.mxu0 0.0
        %423 = vmatprep.subr.mxu0 0.0
        %424 = vmatpush1.msra.mxu0 0.0
        %425 = vmatprep.subr.mxu0 0.0
        %426 = vmatpush1.msra.mxu0 0.0
        %427 = vmatprep.subr.mxu0 0.0
        %428 = vmatpush1.msra.mxu0 0.0
        %429 = vmatprep.subr.mxu0 0.0
        %430 = vmatpush1.msra.mxu0 0.0
        %431 = vmatprep.subr.mxu0 0.0
        %432 = vmatpush1.msra.mxu0 0.0
        %433 = vmatprep.subr.mxu0 0.0
        %434 = vmatpush1.msra.mxu0 0.0
        %435 = vmatprep.subr.mxu0 0.0
        %436 = vmatpush1.msra.mxu0 0.0
        %437 = vmatprep.subr.mxu0 0.0
        %438 = vmatpush1.msra.mxu0 0.0
        %439 = vmatprep.subr.mxu0 0.0
        %440 = vmatpush1.msra.mxu0 0.0
        %441 = vmatprep.subr.mxu0 0.0
        %442 = vmatpush1.msra.mxu0 0.0
        %443 = vmatprep.subr.mxu0 0.0
        %444 = vmatpush1.msra.mxu0 0.0
        %445 = vmatprep.subr.mxu0 0.0
        %446 = vmatpush1.msra.mxu0 0.0
        %447 = vmatprep.subr.mxu0 0.0
        %448 = vmatpush1.msra.mxu0 0.0
        %449 = vmatprep.subr.mxu0 0.0
        %450 = vmatpush1.msra.mxu0 0.0
        %451 = vmatprep.subr.mxu0 0.0
        %452 = vmatpush1.msra.mxu0 0.0
        %453 = vmatprep.subr.mxu0 0.0
        %454 = vmatpush1.msra.mxu0 0.0
        %455 = vmatprep.subr.mxu0 0.0
        %456 = vmatpush1.msra.mxu0 0.0
        %457 = vmatprep.subr.mxu0 0.0
        %458 = vmatpush1.msra.mxu0 0.0
        %459 = vmatprep.subr.mxu0 0.0
        %460 = vmatpush1.msra.mxu0 0.0
        %461 = vmatprep.subr.mxu0 0.0
        %462 = vmatpush1.msra.mxu0 0.0
        %463 = vmatprep.subr.mxu0 0.0
        %464 = vmatpush1.msra.mxu0 0.0
        %465 = vmatprep.subr.mxu0 0.0
        %466 = vmatpush1.msra.mxu0 0.0
        %467 = vmatprep.subr.mxu0 0.0
        %468 = vmatpush1.msra.mxu0 0.0
        %469 = vmatprep.mubr.f32.mxu0 0.0
        %470 = vmatmul.mubr.f32.gmra.mrb[0].mxu0 %v403
        %v471 = vpop.f32.mrb[0].mxu0
        %v472 = vadd.f32 0.0, %v471
        %v473 = vpop.f32.mrb[0].mxu0
        %474 = vdwg.mxu0
        %475 = vst.msk [vmem:[%s284] sm:$0xff] %vm315, %v472
        %v476 = vld [vmem:[%s298] sm:$0xff]
        %v477 = vld [vmem:[%s303 + $0x8] sm:$0xff]
        %479 = vrot.lane.b32.xlu0 %v476, 120
        %v480 = vpop.permute.xlu0 %479
        %v481 = vsel %vm315, %v480, 0
        %483 = vmatprep.subr.mxu0 0.0
        %484 = vmatpush1.msra.mxu0 %v477
        %485 = vmatprep.subr.mxu0 0.0
        %486 = vmatpush1.msra.mxu0 0.0
        %487 = vmatprep.subr.mxu0 0.0
        %488 = vmatpush1.msra.mxu0 0.0
        %489 = vmatprep.subr.mxu0 0.0
        %490 = vmatpush1.msra.mxu0 0.0
        %491 = vmatprep.subr.mxu0 0.0
        %492 = vmatpush1.msra.mxu0 0.0
        %493 = vmatprep.subr.mxu0 0.0
        %494 = vmatpush1.msra.mxu0 0.0
        %495 = vmatprep.subr.mxu0 0.0
        %496 = vmatpush1.msra.mxu0 0.0
        %497 = vmatprep.subr.mxu0 0.0
        %498 = vmatpush1.msra.mxu0 0.0
        %499 = vmatprep.subr.mxu0 0.0
        %500 = vmatpush1.msra.mxu0 0.0
        %501 = vmatprep.subr.mxu0 0.0
        %502 = vmatpush1.msra.mxu0 0.0
        %503 = vmatprep.subr.mxu0 0.0
        %504 = vmatpush1.msra.mxu0 0.0
        %505 = vmatprep.subr.mxu0 0.0
        %506 = vmatpush1.msra.mxu0 0.0
        %507 = vmatprep.subr.mxu0 0.0
        %508 = vmatpush1.msra.mxu0 0.0
        %509 = vmatprep.subr.mxu0 0.0
        %510 = vmatpush1.msra.mxu0 0.0
        %511 = vmatprep.subr.mxu0 0.0
        %512 = vmatpush1.msra.mxu0 0.0
        %513 = vmatprep.subr.mxu0 0.0
        %514 = vmatpush1.msra.mxu0 0.0
        %515 = vmatprep.subr.mxu0 0.0
        %516 = vmatpush1.msra.mxu0 0.0
        %517 = vmatprep.subr.mxu0 0.0
        %518 = vmatpush1.msra.mxu0 0.0
        %519 = vmatprep.subr.mxu0 0.0
        %520 = vmatpush1.msra.mxu0 0.0
        %521 = vmatprep.subr.mxu0 0.0
        %522 = vmatpush1.msra.mxu0 0.0
        %523 = vmatprep.subr.mxu0 0.0
        %524 = vmatpush1.msra.mxu0 0.0
        %525 = vmatprep.subr.mxu0 0.0
        %526 = vmatpush1.msra.mxu0 0.0
        %527 = vmatprep.subr.mxu0 0.0
        %528 = vmatpush1.msra.mxu0 0.0
        %529 = vmatprep.subr.mxu0 0.0
        %530 = vmatpush1.msra.mxu0 0.0
        %531 = vmatprep.subr.mxu0 0.0
        %532 = vmatpush1.msra.mxu0 0.0
        %533 = vmatprep.subr.mxu0 0.0
        %534 = vmatpush1.msra.mxu0 0.0
        %535 = vmatprep.subr.mxu0 0.0
        %536 = vmatpush1.msra.mxu0 0.0
        %537 = vmatprep.subr.mxu0 0.0
        %538 = vmatpush1.msra.mxu0 0.0
        %539 = vmatprep.subr.mxu0 0.0
        %540 = vmatpush1.msra.mxu0 0.0
        %541 = vmatprep.subr.mxu0 0.0
        %542 = vmatpush1.msra.mxu0 0.0
        %543 = vmatprep.subr.mxu0 0.0
        %544 = vmatpush1.msra.mxu0 0.0
        %545 = vmatprep.subr.mxu0 0.0
        %546 = vmatpush1.msra.mxu0 0.0
        %547 = vmatprep.mubr.f32.mxu0 0.0
        %548 = vmatmul.mubr.f32.gmra.mrb[0].mxu0 %v481
        %v549 = vpop.f32.mrb[0].mxu0
        %v550 = vadd.f32 %v312, %v549
        %v551 = vpop.f32.mrb[0].mxu0
        %552 = vdwg.mxu0
        %v553 = vsel %vm315, %v550, -inf
        %554 = vmax.xlane.f32.xlu0 %v553
        %v555 = vpop.xlane.xlu0 %554
        %v556 = vsub.f32 %v550, %v555
        %v557 = vmul.f32 %v556, 1.442695
        %v558 = vpow.pop %v557
        %v559 = vsel %vm315, %v558, 0.0
        %560 = vadd.xlane.f32.xlu0 %v559
        %v561 = vpop.xlane.xlu0 %560
        %v562 = vrcp.pop %v561
        %v563 = vmul.f32 %v558, %v562
        %v564 = vld [vmem:[#allocation2] sm:$0xff]
        %v565 = vadd.f32 %v564, %v563
        %566 = vst.msk [vmem:[#allocation2] sm:$0xff] %vm315, %v565
        %v567 = vld [vmem:[%s307] sm:$0xff]
        %569 = vrot.lane.b32.xlu0 %v567, 120
        %v570 = vpop.permute.xlu0 %569
        %v573 = vsel %vm315, %v563, 0
        %575 = vmatprep.subr.mxu0 0.0
        %576 = vmatpush1.msra.mxu0 %v570
        %577 = vmatprep.subr.mxu0 0.0
        %578 = vmatpush1.msra.mxu0 0.0
        %579 = vmatprep.subr.mxu0 0.0
        %580 = vmatpush1.msra.mxu0 0.0
        %581 = vmatprep.subr.mxu0 0.0
        %582 = vmatpush1.msra.mxu0 0.0
        %583 = vmatprep.subr.mxu0 0.0
        %584 = vmatpush1.msra.mxu0 0.0
        %585 = vmatprep.subr.mxu0 0.0
        %586 = vmatpush1.msra.mxu0 0.0
        %587 = vmatprep.subr.mxu0 0.0
        %588 = vmatpush1.msra.mxu0 0.0
        %589 = vmatprep.subr.mxu0 0.0
        %590 = vmatpush1.msra.mxu0 0.0
        %591 = vmatprep.subr.mxu0 0.0
        %592 = vmatpush1.msra.mxu0 0.0
        %593 = vmatprep.subr.mxu0 0.0
        %594 = vmatpush1.msra.mxu0 0.0
        %595 = vmatprep.subr.mxu0 0.0
        %596 = vmatpush1.msra.mxu0 0.0
        %597 = vmatprep.subr.mxu0 0.0
        %598 = vmatpush1.msra.mxu0 0.0
        %599 = vmatprep.subr.mxu0 0.0
        %600 = vmatpush1.msra.mxu0 0.0
        %601 = vmatprep.subr.mxu0 0.0
        %602 = vmatpush1.msra.mxu0 0.0
        %603 = vmatprep.subr.mxu0 0.0
        %604 = vmatpush1.msra.mxu0 0.0
        %605 = vmatprep.subr.mxu0 0.0
        %606 = vmatpush1.msra.mxu0 0.0
        %607 = vmatprep.subr.mxu0 0.0
        %608 = vmatpush1.msra.mxu0 0.0
        %609 = vmatprep.subr.mxu0 0.0
        %610 = vmatpush1.msra.mxu0 0.0
        %611 = vmatprep.subr.mxu0 0.0
        %612 = vmatpush1.msra.mxu0 0.0
        %613 = vmatprep.subr.mxu0 0.0
        %614 = vmatpush1.msra.mxu0 0.0
        %615 = vmatprep.subr.mxu0 0.0
        %616 = vmatpush1.msra.mxu0 0.0
        %617 = vmatprep.subr.mxu0 0.0
        %618 = vmatpush1.msra.mxu0 0.0
        %619 = vmatprep.subr.mxu0 0.0
        %620 = vmatpush1.msra.mxu0 0.0
        %621 = vmatprep.subr.mxu0 0.0
        %622 = vmatpush1.msra.mxu0 0.0
        %623 = vmatprep.subr.mxu0 0.0
        %624 = vmatpush1.msra.mxu0 0.0
        %625 = vmatprep.subr.mxu0 0.0
        %626 = vmatpush1.msra.mxu0 0.0
        %627 = vmatprep.subr.mxu0 0.0
        %628 = vmatpush1.msra.mxu0 0.0
        %629 = vmatprep.subr.mxu0 0.0
        %630 = vmatpush1.msra.mxu0 0.0
        %631 = vmatprep.subr.mxu0 0.0
        %632 = vmatpush1.msra.mxu0 0.0
        %633 = vmatprep.subr.mxu0 0.0
        %634 = vmatpush1.msra.mxu0 0.0
        %635 = vmatprep.subr.mxu0 0.0
        %636 = vmatpush1.msra.mxu0 0.0
        %637 = vmatprep.subr.mxu0 0.0
        %638 = vmatpush1.msra.mxu0 0.0
        %639 = vmatprep.mubr.f32.mxu0 0.0
        %640 = vmatmul.mubr.f32.gmra.mrb[0].mxu0 %v573
        %v641 = vpop.f32.mrb[0].mxu0
        %v642 = vadd.f32 0.0, %v641
        %v643 = vpop.f32.mrb[0].mxu0
        %644 = vdwg.mxu0
        %646 = vrot.lane.b32.xlu0 %v642, 8
        %v647 = vpop.permute.xlu0 %646
        %vm649 = vcmask 130112
        %650 = vst.msk [vmem:[%s284] sm:$0xff] %vm649, %v647
        %v651 = vld [vmem:[%s298] sm:$0xff]
        %v652 = vld [vmem:[%s303 + $0x10] sm:$0xff]
        %654 = vrot.lane.b32.xlu0 %v651, 112
        %v655 = vpop.permute.xlu0 %654
        %v656 = vsel %vm315, %v655, 0
        %658 = vmatprep.subr.mxu0 0.0
        %659 = vmatpush1.msra.mxu0 %v652
        %660 = vmatprep.subr.mxu0 0.0
        %661 = vmatpush1.msra.mxu0 0.0
        %662 = vmatprep.subr.mxu0 0.0
        %663 = vmatpush1.msra.mxu0 0.0
        %664 = vmatprep.subr.mxu0 0.0
        %665 = vmatpush1.msra.mxu0 0.0
        %666 = vmatprep.subr.mxu0 0.0
        %667 = vmatpush1.msra.mxu0 0.0
        %668 = vmatprep.subr.mxu0 0.0
        %669 = vmatpush1.msra.mxu0 0.0
        %670 = vmatprep.subr.mxu0 0.0
        %671 = vmatpush1.msra.mxu0 0.0
        %672 = vmatprep.subr.mxu0 0.0
        %673 = vmatpush1.msra.mxu0 0.0
        %674 = vmatprep.subr.mxu0 0.0
        %675 = vmatpush1.msra.mxu0 0.0
        %676 = vmatprep.subr.mxu0 0.0
        %677 = vmatpush1.msra.mxu0 0.0
        %678 = vmatprep.subr.mxu0 0.0
        %679 = vmatpush1.msra.mxu0 0.0
        %680 = vmatprep.subr.mxu0 0.0
        %681 = vmatpush1.msra.mxu0 0.0
        %682 = vmatprep.subr.mxu0 0.0
        %683 = vmatpush1.msra.mxu0 0.0
        %684 = vmatprep.subr.mxu0 0.0
        %685 = vmatpush1.msra.mxu0 0.0
        %686 = vmatprep.subr.mxu0 0.0
        %687 = vmatpush1.msra.mxu0 0.0
        %688 = vmatprep.subr.mxu0 0.0
        %689 = vmatpush1.msra.mxu0 0.0
        %690 = vmatprep.subr.mxu0 0.0
        %691 = vmatpush1.msra.mxu0 0.0
        %692 = vmatprep.subr.mxu0 0.0
        %693 = vmatpush1.msra.mxu0 0.0
        %694 = vmatprep.subr.mxu0 0.0
        %695 = vmatpush1.msra.mxu0 0.0
        %696 = vmatprep.subr.mxu0 0.0
        %697 = vmatpush1.msra.mxu0 0.0
        %698 = vmatprep.subr.mxu0 0.0
        %699 = vmatpush1.msra.mxu0 0.0
        %700 = vmatprep.subr.mxu0 0.0
        %701 = vmatpush1.msra.mxu0 0.0
        %702 = vmatprep.subr.mxu0 0.0
        %703 = vmatpush1.msra.mxu0 0.0
        %704 = vmatprep.subr.mxu0 0.0
        %705 = vmatpush1.msra.mxu0 0.0
        %706 = vmatprep.subr.mxu0 0.0
        %707 = vmatpush1.msra.mxu0 0.0
        %708 = vmatprep.subr.mxu0 0.0
        %709 = vmatpush1.msra.mxu0 0.0
        %710 = vmatprep.subr.mxu0 0.0
        %711 = vmatpush1.msra.mxu0 0.0
        %712 = vmatprep.subr.mxu0 0.0
        %713 = vmatpush1.msra.mxu0 0.0
        %714 = vmatprep.subr.mxu0 0.0
        %715 = vmatpush1.msra.mxu0 0.0
        %716 = vmatprep.subr.mxu0 0.0
        %717 = vmatpush1.msra.mxu0 0.0
        %718 = vmatprep.subr.mxu0 0.0
        %719 = vmatpush1.msra.mxu0 0.0
        %720 = vmatprep.subr.mxu0 0.0
        %721 = vmatpush1.msra.mxu0 0.0
        %722 = vmatprep.mubr.f32.mxu0 0.0
        %723 = vmatmul.mubr.f32.gmra.mrb[0].mxu0 %v656
        %v724 = vpop.f32.mrb[0].mxu0
        %v725 = vadd.f32 %v312, %v724
        %v726 = vpop.f32.mrb[0].mxu0
        %727 = vdwg.mxu0
        %v728 = vsel %vm315, %v725, -inf
        %729 = vmax.xlane.f32.xlu0 %v728
        %v730 = vpop.xlane.xlu0 %729
        %v731 = vsub.f32 %v725, %v730
        %v732 = vmul.f32 %v731, 1.442695
        %v733 = vpow.pop %v732
        %v734 = vsel %vm315, %v733, 0.0
        %735 = vadd.xlane.f32.xlu0 %v734
        %v736 = vpop.xlane.xlu0 %735
        %v737 = vrcp.pop %v736
        %v738 = vmul.f32 %v733, %v737
        %v739 = vld [vmem:[#allocation2] sm:$0xff]
        %v740 = vadd.f32 %v739, %v738
        %741 = vst.msk [vmem:[#allocation2] sm:$0xff] %vm315, %v740
        %v742 = vld [vmem:[%s307] sm:$0xff]
        %744 = vrot.lane.b32.xlu0 %v742, 112
        %v745 = vpop.permute.xlu0 %744
        %v748 = vsel %vm315, %v738, 0
        %750 = vmatprep.subr.mxu0 0.0
        %751 = vmatpush1.msra.mxu0 %v745
        %752 = vmatprep.subr.mxu0 0.0
        %753 = vmatpush1.msra.mxu0 0.0
        %754 = vmatprep.subr.mxu0 0.0
        %755 = vmatpush1.msra.mxu0 0.0
        %756 = vmatprep.subr.mxu0 0.0
        %757 = vmatpush1.msra.mxu0 0.0
        %758 = vmatprep.subr.mxu0 0.0
        %759 = vmatpush1.msra.mxu0 0.0
        %760 = vmatprep.subr.mxu0 0.0
        %761 = vmatpush1.msra.mxu0 0.0
        %762 = vmatprep.subr.mxu0 0.0
        %763 = vmatpush1.msra.mxu0 0.0
        %764 = vmatprep.subr.mxu0 0.0
        %765 = vmatpush1.msra.mxu0 0.0
        %766 = vmatprep.subr.mxu0 0.0
        %767 = vmatpush1.msra.mxu0 0.0
        %768 = vmatprep.subr.mxu0 0.0
        %769 = vmatpush1.msra.mxu0 0.0
        %770 = vmatprep.subr.mxu0 0.0
        %771 = vmatpush1.msra.mxu0 0.0
        %772 = vmatprep.subr.mxu0 0.0
        %773 = vmatpush1.msra.mxu0 0.0
        %774 = vmatprep.subr.mxu0 0.0
        %775 = vmatpush1.msra.mxu0 0.0
        %776 = vmatprep.subr.mxu0 0.0
        %777 = vmatpush1.msra.mxu0 0.0
        %778 = vmatprep.subr.mxu0 0.0
        %779 = vmatpush1.msra.mxu0 0.0
        %780 = vmatprep.subr.mxu0 0.0
        %781 = vmatpush1.msra.mxu0 0.0
        %782 = vmatprep.subr.mxu0 0.0
        %783 = vmatpush1.msra.mxu0 0.0
        %784 = vmatprep.subr.mxu0 0.0
        %785 = vmatpush1.msra.mxu0 0.0
        %786 = vmatprep.subr.mxu0 0.0
        %787 = vmatpush1.msra.mxu0 0.0
        %788 = vmatprep.subr.mxu0 0.0
        %789 = vmatpush1.msra.mxu0 0.0
        %790 = vmatprep.subr.mxu0 0.0
        %791 = vmatpush1.msra.mxu0 0.0
        %792 = vmatprep.subr.mxu0 0.0
        %793 = vmatpush1.msra.mxu0 0.0
        %794 = vmatprep.subr.mxu0 0.0
        %795 = vmatpush1.msra.mxu0 0.0
        %796 = vmatprep.subr.mxu0 0.0
        %797 = vmatpush1.msra.mxu0 0.0
        %798 = vmatprep.subr.mxu0 0.0
        %799 = vmatpush1.msra.mxu0 0.0
        %800 = vmatprep.subr.mxu0 0.0
        %801 = vmatpush1.msra.mxu0 0.0
        %802 = vmatprep.subr.mxu0 0.0
        %803 = vmatpush1.msra.mxu0 0.0
        %804 = vmatprep.subr.mxu0 0.0
        %805 = vmatpush1.msra.mxu0 0.0
        %806 = vmatprep.subr.mxu0 0.0
        %807 = vmatpush1.msra.mxu0 0.0
        %808 = vmatprep.subr.mxu0 0.0
        %809 = vmatpush1.msra.mxu0 0.0
        %810 = vmatprep.subr.mxu0 0.0
        %811 = vmatpush1.msra.mxu0 0.0
        %812 = vmatprep.subr.mxu0 0.0
        %813 = vmatpush1.msra.mxu0 0.0
        %814 = vmatprep.mubr.f32.mxu0 0.0
        %815 = vmatmul.mubr.f32.gmra.mrb[0].mxu0 %v748
        %v816 = vpop.f32.mrb[0].mxu0
        %v817 = vadd.f32 0.0, %v816
        %v818 = vpop.f32.mrb[0].mxu0
        %819 = vdwg.mxu0
        %821 = vrot.lane.b32.xlu0 %v817, 16
        %v822 = vpop.permute.xlu0 %821
        %vm824 = vcmask 195712
        %825 = vst.msk [vmem:[%s284] sm:$0xff] %vm824, %v822
        %v826 = vld [vmem:[%s298] sm:$0xff]
        %v827 = vld [vmem:[%s303 + $0x18] sm:$0xff]
        %829 = vrot.lane.b32.xlu0 %v826, 104
        %v830 = vpop.permute.xlu0 %829
        %v831 = vsel %vm315, %v830, 0
        %833 = vmatprep.subr.mxu0 0.0
        %834 = vmatpush1.msra.mxu0 %v827
        %835 = vmatprep.subr.mxu0 0.0
        %836 = vmatpush1.msra.mxu0 0.0
        %837 = vmatprep.subr.mxu0 0.0
        %838 = vmatpush1.msra.mxu0 0.0
        %839 = vmatprep.subr.mxu0 0.0
        %840 = vmatpush1.msra.mxu0 0.0
        %841 = vmatprep.subr.mxu0 0.0
        %842 = vmatpush1.msra.mxu0 0.0
        %843 = vmatprep.subr.mxu0 0.0
        %844 = vmatpush1.msra.mxu0 0.0
        %845 = vmatprep.subr.mxu0 0.0
        %846 = vmatpush1.msra.mxu0 0.0
        %847 = vmatprep.subr.mxu0 0.0
        %848 = vmatpush1.msra.mxu0 0.0
        %849 = vmatprep.subr.mxu0 0.0
        %850 = vmatpush1.msra.mxu0 0.0
        %851 = vmatprep.subr.mxu0 0.0
        %852 = vmatpush1.msra.mxu0 0.0
        %853 = vmatprep.subr.mxu0 0.0
        %854 = vmatpush1.msra.mxu0 0.0
        %855 = vmatprep.subr.mxu0 0.0
        %856 = vmatpush1.msra.mxu0 0.0
        %857 = vmatprep.subr.mxu0 0.0
        %858 = vmatpush1.msra.mxu0 0.0
        %859 = vmatprep.subr.mxu0 0.0
        %860 = vmatpush1.msra.mxu0 0.0
        %861 = vmatprep.subr.mxu0 0.0
        %862 = vmatpush1.msra.mxu0 0.0
        %863 = vmatprep.subr.mxu0 0.0
        %864 = vmatpush1.msra.mxu0 0.0
        %865 = vmatprep.subr.mxu0 0.0
        %866 = vmatpush1.msra.mxu0 0.0
        %867 = vmatprep.subr.mxu0 0.0
        %868 = vmatpush1.msra.mxu0 0.0
        %869 = vmatprep.subr.mxu0 0.0
        %870 = vmatpush1.msra.mxu0 0.0
        %871 = vmatprep.subr.mxu0 0.0
        %872 = vmatpush1.msra.mxu0 0.0
        %873 = vmatprep.subr.mxu0 0.0
        %874 = vmatpush1.msra.mxu0 0.0
        %875 = vmatprep.subr.mxu0 0.0
        %876 = vmatpush1.msra.mxu0 0.0
        %877 = vmatprep.subr.mxu0 0.0
        %878 = vmatpush1.msra.mxu0 0.0
        %879 = vmatprep.subr.mxu0 0.0
        %880 = vmatpush1.msra.mxu0 0.0
        %881 = vmatprep.subr.mxu0 0.0
        %882 = vmatpush1.msra.mxu0 0.0
        %883 = vmatprep.subr.mxu0 0.0
        %884 = vmatpush1.msra.mxu0 0.0
        %885 = vmatprep.subr.mxu0 0.0
        %886 = vmatpush1.msra.mxu0 0.0
        %887 = vmatprep.subr.mxu0 0.0
        %888 = vmatpush1.msra.mxu0 0.0
        %889 = vmatprep.subr.mxu0 0.0
        %890 = vmatpush1.msra.mxu0 0.0
        %891 = vmatprep.subr.mxu0 0.0
        %892 = vmatpush1.msra.mxu0 0.0
        %893 = vmatprep.subr.mxu0 0.0
        %894 = vmatpush1.msra.mxu0 0.0
        %895 = vmatprep.subr.mxu0 0.0
        %896 = vmatpush1.msra.mxu0 0.0
        %897 = vmatprep.mubr.f32.mxu0 0.0
        %898 = vmatmul.mubr.f32.gmra.mrb[0].mxu0 %v831
        %v899 = vpop.f32.mrb[0].mxu0
        %v900 = vadd.f32 %v312, %v899
        %v901 = vpop.f32.mrb[0].mxu0
        %902 = vdwg.mxu0
        %v903 = vsel %vm315, %v900, -inf
        %904 = vmax.xlane.f32.xlu0 %v903
        %v905 = vpop.xlane.xlu0 %904
        %v906 = vsub.f32 %v900, %v905
        %v907 = vmul.f32 %v906, 1.442695
        %v908 = vpow.pop %v907
        %v909 = vsel %vm315, %v908, 0.0
        %910 = vadd.xlane.f32.xlu0 %v909
        %v911 = vpop.xlane.xlu0 %910
        %v912 = vrcp.pop %v911
        %v913 = vmul.f32 %v908, %v912
        %v914 = vld [vmem:[#allocation2] sm:$0xff]
        %v915 = vadd.f32 %v914, %v913
        %916 = vst.msk [vmem:[#allocation2] sm:$0xff] %vm315, %v915
        %v917 = vld [vmem:[%s307] sm:$0xff]
        %919 = vrot.lane.b32.xlu0 %v917, 104
        %v920 = vpop.permute.xlu0 %919
        %v923 = vsel %vm315, %v913, 0
        %925 = vmatprep.subr.mxu0 0.0
        %926 = vmatpush1.msra.mxu0 %v920
        %927 = vmatprep.subr.mxu0 0.0
        %928 = vmatpush1.msra.mxu0 0.0
        %929 = vmatprep.subr.mxu0 0.0
        %930 = vmatpush1.msra.mxu0 0.0
        %931 = vmatprep.subr.mxu0 0.0
        %932 = vmatpush1.msra.mxu0 0.0
        %933 = vmatprep.subr.mxu0 0.0
        %934 = vmatpush1.msra.mxu0 0.0
        %935 = vmatprep.subr.mxu0 0.0
        %936 = vmatpush1.msra.mxu0 0.0
        %937 = vmatprep.subr.mxu0 0.0
        %938 = vmatpush1.msra.mxu0 0.0
        %939 = vmatprep.subr.mxu0 0.0
        %940 = vmatpush1.msra.mxu0 0.0
        %941 = vmatprep.subr.mxu0 0.0
        %942 = vmatpush1.msra.mxu0 0.0
        %943 = vmatprep.subr.mxu0 0.0
        %944 = vmatpush1.msra.mxu0 0.0
        %945 = vmatprep.subr.mxu0 0.0
        %946 = vmatpush1.msra.mxu0 0.0
        %947 = vmatprep.subr.mxu0 0.0
        %948 = vmatpush1.msra.mxu0 0.0
        %949 = vmatprep.subr.mxu0 0.0
        %950 = vmatpush1.msra.mxu0 0.0
        %951 = vmatprep.subr.mxu0 0.0
        %952 = vmatpush1.msra.mxu0 0.0
        %953 = vmatprep.subr.mxu0 0.0
        %954 = vmatpush1.msra.mxu0 0.0
        %955 = vmatprep.subr.mxu0 0.0
        %956 = vmatpush1.msra.mxu0 0.0
        %957 = vmatprep.subr.mxu0 0.0
        %958 = vmatpush1.msra.mxu0 0.0
        %959 = vmatprep.subr.mxu0 0.0
        %960 = vmatpush1.msra.mxu0 0.0
        %961 = vmatprep.subr.mxu0 0.0
        %962 = vmatpush1.msra.mxu0 0.0
        %963 = vmatprep.subr.mxu0 0.0
        %964 = vmatpush1.msra.mxu0 0.0
        %965 = vmatprep.subr.mxu0 0.0
        %966 = vmatpush1.msra.mxu0 0.0
        %967 = vmatprep.subr.mxu0 0.0
        %968 = vmatpush1.msra.mxu0 0.0
        %969 = vmatprep.subr.mxu0 0.0
        %970 = vmatpush1.msra.mxu0 0.0
        %971 = vmatprep.subr.mxu0 0.0
        %972 = vmatpush1.msra.mxu0 0.0
        %973 = vmatprep.subr.mxu0 0.0
        %974 = vmatpush1.msra.mxu0 0.0
        %975 = vmatprep.subr.mxu0 0.0
        %976 = vmatpush1.msra.mxu0 0.0
        %977 = vmatprep.subr.mxu0 0.0
        %978 = vmatpush1.msra.mxu0 0.0
        %979 = vmatprep.subr.mxu0 0.0
        %980 = vmatpush1.msra.mxu0 0.0
        %981 = vmatprep.subr.mxu0 0.0
        %982 = vmatpush1.msra.mxu0 0.0
        %983 = vmatprep.subr.mxu0 0.0
        %984 = vmatpush1.msra.mxu0 0.0
        %985 = vmatprep.subr.mxu0 0.0
        %986 = vmatpush1.msra.mxu0 0.0
        %987 = vmatprep.subr.mxu0 0.0
        %988 = vmatpush1.msra.mxu0 0.0
        %989 = vmatprep.mubr.f32.mxu0 0.0
        %990 = vmatmul.mubr.f32.gmra.mrb[0].mxu0 %v923
        %v991 = vpop.f32.mrb[0].mxu0
        %v992 = vadd.f32 0.0, %v991
        %v993 = vpop.f32.mrb[0].mxu0
        %994 = vdwg.mxu0
        %996 = vrot.lane.b32.xlu0 %v992, 24
        %v997 = vpop.permute.xlu0 %996
        %vm999 = vcmask 261312
        %1000 = vst.msk [vmem:[%s284] sm:$0xff] %vm999, %v997
        %v1001 = vld [vmem:[#allocation2] sm:$0xff]
        %v1002 = vmul.f32 %v1001, 0.25
        %1003 = vst.msk [vmem:[%s291] sm:$0xff] %vm315, %v1002
        %s1004 = sand.u32 %s151, 1
        %s1005 = scalar_lea.sflag [#allocation4], %s1004
        %s1006 = sand.u32 %s151, 1
        %s1007 = smul.addr %s1006, 8
        %s1008 = scalar_lea.vmem [#allocation3], %s1007
        %s1009 = sand.u32 %s179, 1
        %s1010 = scalar_lea.sflag [#allocation6], %s1009
        %s1011 = sand.u32 %s179, 1
        %s1012 = smul.addr %s1011, 8
        %s1013 = scalar_lea.vmem [#allocation5], %s1012
        // Predicated region
        $region37: #{tpu_custom_call.1} parent=35 // pred_check
          %p1014 = pneg %p161
        $region38: #{tpu_custom_call.1} parent=35 // pred_check_branch
          %1016 = sbr.rel (%p1014) target = $region40
        $region39: #{tpu_custom_call.1} parent=35 // pred_region
          %s1018 = ssub.s32 128, 128
          %1019 = vsyncadd %s1005, %s1018
          %s1020 = sadd.s32 %s28, %s27
          %s1021 = smul.addr %s1020, 128
          %s1022 = scalar_lea.hbm %s4, %s1021
          %s1024 = sshll.u32 %s1008, 4
          %s1025 = int_to_ptr.vmem [resolvable:$true] %s1024
          %1027 = dma.vmem_to_hbm [thread:$0]  %s1025, 128, %s1022, %s1005
        $region40: #{tpu_custom_call.1} parent=35 // pred_fallthru
          _
        // Predicated region
        $region41: #{tpu_custom_call.1} parent=35 // pred_check
          %p1028 = pneg %p189
        $region42: #{tpu_custom_call.1} parent=35 // pred_check_branch
          %1030 = sbr.rel (%p1028) target = $region44
        $region43: #{tpu_custom_call.1} parent=35 // pred_region
          %s1032 = ssub.s32 128, 128
          %1033 = vsyncadd %s1010, %s1032
          %s1034 = sadd.s32 %s28, %s27
          %s1035 = smul.addr %s1034, 128
          %s1036 = scalar_lea.hbm %s5, %s1035
          %s1038 = sshll.u32 %s1013, 4
          %s1039 = int_to_ptr.vmem [resolvable:$true] %s1038
          %1041 = dma.vmem_to_hbm [thread:$0]  %s1039, 128, %s1036, %s1010
        $region44: #{tpu_custom_call.1} parent=35 // pred_fallthru
          _
      $region36: #{tpu_custom_call.1} parent=5 // pred_fallthru
        _
      %p1042 = scmp.le.s32.totalorder 2, %s18
      // Predicated region
      $region45: #{tpu_custom_call.1} parent=5 // pred_check
        %p1043 = pneg %p1042
      $region46: #{tpu_custom_call.1} parent=5 // pred_check_branch
        %1045 = sbr.rel (%p1043) target = $region48
      $region47: #{tpu_custom_call.1} parent=5 // pred_region
        %s1046 = ssub.s32 %s18, 2
        // Predicated region
        $region49: #{tpu_custom_call.1} parent=47 // pred_check
          %p1047 = pneg %p167
        $region50: #{tpu_custom_call.1} parent=47 // pred_check_branch
          %1049 = sbr.rel (%p1047) target = $region52
        $region51: #{tpu_custom_call.1} parent=47 // pred_region
          %s1050 = sand.u32 %s152, 1
          %s1051 = scalar_lea.sflag [#allocation4], %s1050
          %s1052 = sand.u32 %s152, 1
          %s1053 = smul.addr %s1052, 8
          %s1054 = scalar_lea.vmem [#allocation3], %s1053
          %1055 = dma.done %s1051, 128
        $region52: #{tpu_custom_call.1} parent=47 // pred_fallthru
          _
        // Predicated region
        $region53: #{tpu_custom_call.1} parent=47 // pred_check
          %p1056 = pneg %p195
        $region54: #{tpu_custom_call.1} parent=47 // pred_check_branch
          %1058 = sbr.rel (%p1056) target = $region56
        $region55: #{tpu_custom_call.1} parent=47 // pred_region
          %s1059 = sand.u32 %s180, 1
          %s1060 = scalar_lea.sflag [#allocation6], %s1059
          %s1061 = sand.u32 %s180, 1
          %s1062 = smul.addr %s1061, 8
          %s1063 = scalar_lea.vmem [#allocation5], %s1062
          %1064 = dma.done %s1060, 128
        $region56: #{tpu_custom_call.1} parent=47 // pred_fallthru
          _
      $region48: #{tpu_custom_call.1} parent=5 // pred_fallthru
        _
    $region6: #{tpu_custom_call.1} parent=1 // loop_footer
      %s22 = sadd.s32 1, %s18
    $region7: #{tpu_custom_call.1} parent=1 // loop_footer_branch
      %17 = sbr.rel target = $region3
    $region8: #{tpu_custom_call.1} parent=1 // loop_exit
      _
    %1065 = vsyncpa [#allocation4], 1
    %s1066 = scalar_lea.sflag [#allocation4], 1
    %1067 = vsyncpa %s1066, 1
    %1068 = vsyncpa [#allocation6], 1
    %s1069 = scalar_lea.sflag [#allocation6], 1
    %1070 = vsyncpa %s1069, 1

</llo_original>
